<compile_context>
chip_gen: v7x
topology: tpu7x:2x2x1
jax: 0.10.0
libtpu: 0.0.40
codegen_flags: <defaults>
</compile_context>

<pallas_src>
import math
import functools

import jax
import jax.numpy as jnp
from jax import lax
from jax.experimental import pallas as pl
from jax.experimental.pallas import tpu as pltpu


# Explicit VMEM budget.  Largest intended tiles (tq = tk = 128, d_model <= 1024, bf16)
# double-buffered:  2 * (tq*D + 2*tk*D + tq*D) * 2B  +  f32 scratch  <  ~4 MiB, and the
# row-tiled linear (tn = 256, resident (D, D) weight) stays < ~16 MiB even in f32 — both
# comfortably inside the 32 MiB scoped default of the most VMEM-constrained chip (v7x).
_VMEM_LIMIT_BYTES = 32 * 1024 * 1024


# ----------------------------- stacked linear kernel ----------------------------- #

def _stacked_linear_kernel(x_ref, w_ref, b_ref, o_ref):
    # x: (1, tn, Din)   w: (1, Din, Dout)   b: (1, 1, Dout)   o: (1, tn, Dout)
    acc = jnp.dot(x_ref[0], w_ref[0], preferred_element_type=jnp.float32)
    o_ref[0] = (acc + b_ref[0]).astype(o_ref.dtype)


def pallas_stacked_linear(x, w, b, *, out_dtype=jnp.float32, tile_n=256):
    """y[j] = x[j] @ w[j] + b[j] for j in range(J), row-tiled & pipelined.

    x: (J, N, Din), w: (J, Din, Dout), b: (J, 1, Dout) float32  ->  (J, N, Dout).
    All J projections share one pallas_call / one grid (J, N-tiles).
    """
    J, N, Din = x.shape
    Dout = w.shape[-1]
    tn = N if N <= tile_n else tile_n
    grid = (J, pl.cdiv(N, tn))
    return pl.pallas_call(
        _stacked_linear_kernel,
        out_shape=jax.ShapeDtypeStruct((J, N, Dout), out_dtype),
        grid_spec=pltpu.PrefetchScalarGridSpec(
            num_scalar_prefetch=0,
            grid=grid,
            in_specs=[
                pl.BlockSpec((1, tn, Din), lambda j, i: (j, i, 0)),
                pl.BlockSpec((1, Din, Dout), lambda j, i: (j, 0, 0)),   # resident per j
                pl.BlockSpec((1, 1, Dout), lambda j, i: (j, 0, 0)),
            ],
            out_specs=pl.BlockSpec((1, tn, Dout), lambda j, i: (j, i, 0)),
        ),
        compiler_params=pltpu.CompilerParams(
            dimension_semantics=("parallel", "parallel"),
            vmem_limit_bytes=_VMEM_LIMIT_BYTES,
        ),
    )(x, w, b)


# ----------------------------- flash attention kernel ---------------------------- #

def _flash_mha_kernel(*refs, h, d_k, tq, tk, causal, has_mask):
    if has_mask:
        q_ref, k_ref, v_ref, mask_ref, o_ref, m_sc, l_sc, acc_sc = refs
    else:
        q_ref, k_ref, v_ref, o_ref, m_sc, l_sc, acc_sc = refs

    ki = pl.program_id(2)

    @pl.when(ki == 0)
    def _init():
        m_sc[...] = jnp.full_like(m_sc, -jnp.inf)
        l_sc[...] = jnp.zeros_like(l_sc)
        acc_sc[...] = jnp.zeros_like(acc_sc)

    q = q_ref[0, 0]        # (tq, D)  lane-dense (D = h * d_k)
    k = k_ref[0, 0]        # (tk, D)
    v = v_ref[0, 0]        # (tk, D)

    # Mask (shared across heads), computed once per grid step.
    keep = None
    if has_mask:
        keep = mask_ref[0] != 0                                            # (tq, tk)
    if causal:
        row = pl.program_id(1) * tq + lax.broadcasted_iota(jnp.int32, (tq, tk), 0)
        col = ki * tk + lax.broadcasted_iota(jnp.int32, (tq, tk), 1)
        ckeep = col <= row
        keep = ckeep if keep is None else jnp.logical_and(keep, ckeep)

    inv_scale = jnp.float32(1.0 / math.sqrt(d_k))

    # Static unroll over heads; heads stay packed along lanes of q/k/v.
    for head in range(h):
        lo = head * d_k
        qh = q[:, lo:lo + d_k]                     # (tq, d_k)
        kh = k[:, lo:lo + d_k]                     # (tk, d_k)
        vh = v[:, lo:lo + d_k]                     # (tk, d_k)

        # Contract on trailing d_k -> no transposed copy of K.
        s = lax.dot_general(qh, kh, (((1,), (1,)), ((), ())),
                            preferred_element_type=jnp.float32) * inv_scale   # (tq, tk)
        if keep is not None:
            s = jnp.where(keep, s, jnp.float32(-1e9))

        m_prev = m_sc[head]                                    # (tq, 1)
        m_new = jnp.maximum(m_prev, s.max(axis=-1, keepdims=True))
        alpha = jnp.exp(m_prev - m_new)
        p = jnp.exp(s - m_new)                                 # (tq, tk) f32
        l_sc[head] = alpha * l_sc[head] + p.sum(axis=-1, keepdims=True)
        acc_sc[head] = alpha * acc_sc[head] + jnp.dot(
            p.astype(v.dtype), vh, preferred_element_type=jnp.float32)
        m_sc[head] = m_new

    @pl.when(ki == pl.num_programs(2) - 1)
    def _finalize():
        for head in range(h):
            inv_l = pl.reciprocal(l_sc[head], approx=True)     # (tq, 1)
            o_ref[0, :, pl.ds(head * d_k, d_k)] = (
                acc_sc[head] * inv_l).astype(o_ref.dtype)


def pallas_flash_attention(q_pack, kv_pack, *, h, q_idx, k_idx, v_idx,
                           mask=None, causal=False, out_dtype=jnp.float32,
                           tq=128, tk=128):
    """Multi-head scaled-dot-product attention.

    q_pack:  (Jq, B, Sq, D)   -> q = q_pack[q_idx]
    kv_pack: (Jk, B, Sk, D)   -> k = kv_pack[k_idx], v = kv_pack[v_idx]
    mask:    optional (B, Sq, Sk) int32 (nonzero = keep), broadcast over heads.
    causal:  generate the causal mask in-kernel (no mask DMA).
    Returns  (B, Sq, D) with heads merged along the last dim.
    """
    _, B, Sq, D = q_pack.shape
    Sk = kv_pack.shape[2]
    assert D % h == 0
    d_k = D // h

    tq = Sq if Sq <= tq else tq
    tk = Sk if Sk <= tk else tk
    assert Sq % tq == 0 and Sk % tk == 0, "sequence lengths must divide the tile sizes"
    grid = (B, Sq // tq, Sk // tk)

    has_mask = mask is not None
    in_specs = [
        pl.BlockSpec((1, 1, tq, D), lambda b, qi, ki: (q_idx, b, qi, 0)),
        pl.BlockSpec((1, 1, tk, D), lambda b, qi, ki: (k_idx, b, ki, 0)),
        pl.BlockSpec((1, 1, tk, D), lambda b, qi, ki: (v_idx, b, ki, 0)),
    ]
    args = [q_pack, kv_pack, kv_pack]
    if has_mask:
        in_specs.append(pl.BlockSpec((1, tq, tk), lambda b, qi, ki: (b, qi, ki)))
        args.append(mask)

    kernel = functools.partial(_flash_mha_kernel, h=h, d_k=d_k, tq=tq, tk=tk,
                               causal=causal, has_mask=has_mask)

    return pl.pallas_call(
        kernel,
        out_shape=jax.ShapeDtypeStruct((B, Sq, D), out_dtype),
        grid_spec=pltpu.PrefetchScalarGridSpec(
            num_scalar_prefetch=0,
            grid=grid,
            in_specs=in_specs,
            out_specs=pl.BlockSpec((1, tq, D), lambda b, qi, ki: (b, qi, 0)),
            scratch_shapes=[
                pltpu.VMEM((h, tq, 1), jnp.float32),      # running max m
                pltpu.VMEM((h, tq, 1), jnp.float32),      # running denom l
                pltpu.VMEM((h, tq, d_k), jnp.float32),    # output accumulator
            ],
        ),
        compiler_params=pltpu.CompilerParams(
            dimension_semantics=("parallel", "parallel", "arbitrary"),
            vmem_limit_bytes=_VMEM_LIMIT_BYTES,
        ),
    )(*args)


# --------------------------------- module wrapper --------------------------------- #

class MultiHeadedAttentionPallas:
    """Forward-pass equivalent of the PyTorch MultiHeadedAttention (eval mode)."""

    def __init__(self, h, d_model, key, *, compute_dtype=jnp.float32,
                 tq=128, tk=128, tile_n=256):
        assert d_model % h == 0
        self.h = h
        self.d_k = d_model // h
        self.d_model = d_model
        self.compute_dtype = compute_dtype      # bf16 on v6e/v7x feeds the MXU at full rate
        self.tq, self.tk, self.tile_n = tq, tk, tile_n

        # 4 Linear(d_model, d_model) layers, deterministic init (weights stored as (in, out)).
        bound = 1.0 / math.sqrt(d_model)
        keys = jax.random.split(key, 8)
        self.ws = [jax.random.uniform(keys[2 * i], (d_model, d_model),
                                      jnp.float32, -bound, bound) for i in range(4)]
        self.bs = [jax.random.uniform(keys[2 * i + 1], (1, d_model),
                                      jnp.float32, -bound, bound) for i in range(4)]
        # Stacked parameters for the fused projections.
        self.w_qkv = jnp.stack(self.ws[:3], 0)     # (3, D, D)
        self.b_qkv = jnp.stack(self.bs[:3], 0)     # (3, 1, D)
        self.w_out = self.ws[3][None]              # (1, D, D)
        self.b_out = self.bs[3][None]              # (1, 1, D)

    def __call__(self, query, key, value, mask=None, is_causal=False):
        # query/key/value: (seq, batch, d_model) -> output (seq, batch, d_model)
        Sq, B, D = query.shape
        Sk = key.shape[0]
        cd = self.compute_dtype

        # Batch-first once (as in the PyTorch forward); no per-head transposes anywhere.
        q_bf = jnp.transpose(query, (1, 0, 2))     # (B, Sq, D)
        k_bf = jnp.transpose(key, (1, 0, 2))       # (B, Sk, D)
        v_bf = jnp.transpose(value, (1, 0, 2))     # (B, Sk, D)

        if Sq == Sk:
            # Fused Q/K/V projection: one pallas_call, all three matmuls on one grid.
            x_in = jnp.stack([q_bf, k_bf, v_bf], 0).reshape(3, B * Sq, D).astype(cd)
            qkv = pallas_stacked_linear(x_in, self.w_qkv.astype(cd), self.b_qkv,
                                        out_dtype=cd, tile_n=self.tile_n)
            qkv = qkv.reshape(3, B, Sq, D)
            q_pack, kv_pack = qkv, qkv
            qi_, ki_, vi_ = 0, 1, 2
        else:
            q_p = pallas_stacked_linear(q_bf.reshape(1, B * Sq, D).astype(cd),
                                        self.w_qkv[:1].astype(cd), self.b_qkv[:1],
                                        out_dtype=cd, tile_n=self.tile_n)
            kv_in = jnp.stack([k_bf, v_bf], 0).reshape(2, B * Sk, D).astype(cd)
            kv_p = pallas_stacked_linear(kv_in, self.w_qkv[1:].astype(cd), self.b_qkv[1:],
                                         out_dtype=cd, tile_n=self.tile_n)
            q_pack = q_p.reshape(1, B, Sq, D)
            kv_pack = kv_p.reshape(2, B, Sk, D)
            qi_, ki_, vi_ = 0, 0, 1

        # Mask handling: causal is generated in-kernel (no DMA), None applies no masking.
        if is_causal or mask is None:
            mask_arr = None
        else:
            mask_arr = jnp.broadcast_to(mask, (B, Sq, Sk)).astype(jnp.int32)

        x_attn = pallas_flash_attention(
            q_pack, kv_pack, h=self.h, q_idx=qi_, k_idx=ki_, v_idx=vi_,
            mask=mask_arr, causal=is_causal, out_dtype=cd,
            tq=self.tq, tk=self.tk)                               # (B, Sq, D)

        # TODO(synk): nn.Dropout(p=0.1) on attention probabilities is identity (eval mode).

        # Output projection (row-tiled), then back to (seq, batch, d_model).
        y = pallas_stacked_linear(x_attn.reshape(1, B * Sq, D),
                                  self.w_out.astype(cd), self.b_out,
                                  out_dtype=jnp.float32, tile_n=self.tile_n)
        y = y.reshape(B, Sq, D)
        return jnp.transpose(y, (1, 0, 2))


# ----------------------------- pure-JAX reference check ---------------------------- #

def _reference(mha, query, key, value, mask):
    Sq, B, D = query.shape
    Sk = key.shape[0]
    h, d_k = mha.h, mha.d_k
    q = jnp.transpose(query, (1, 0, 2)) @ mha.ws[0] + mha.bs[0]
    k = jnp.transpose(key, (1, 0, 2)) @ mha.ws[1] + mha.bs[1]
    v = jnp.transpose(value, (1, 0, 2)) @ mha.ws[2] + mha.bs[2]
    q = q.reshape(B, Sq, h, d_k).transpose(0, 2, 1, 3)
    k = k.reshape(B, Sk, h, d_k).transpose(0, 2, 1, 3)
    v = v.reshape(B, Sk, h, d_k).transpose(0, 2, 1, 3)
    scores = jnp.einsum("bhqd,bhkd->bhqk", q, k) / math.sqrt(d_k)
    if mask is not None:
        scores = jnp.where(mask[:, None, :, :] == 0, -1e9, scores)
    p = jax.nn.softmax(scores, axis=-1)
    x = jnp.einsum("bhqk,bhkd->bhqd", p, v)
    x = x.transpose(0, 2, 1, 3).reshape(B, Sq, h * d_k)
    x = x @ mha.ws[3] + mha.bs[3]
    return jnp.transpose(x, (1, 0, 2))


# ----------------------------------------- main ------------------------------------ #

if __name__ == "__main__":
    key0 = jax.random.PRNGKey(0)
    k_param, k_q, k_k, k_v, k_k2, k_v2 = jax.random.split(key0, 6)

    seq, batch, d_model, heads = 8, 2, 32, 4
    mha = MultiHeadedAttentionPallas(heads, d_model, k_param)

    query = jax.random.normal(k_q, (seq, batch, d_model), dtype=jnp.float32)
    keyv = jax.random.normal(k_k, (seq, batch, d_model), dtype=jnp.float32)
    value = jax.random.normal(k_v, (seq, batch, d_model), dtype=jnp.float32)

    causal = jnp.broadcast_to(
        jnp.tril(jnp.ones((seq, seq), dtype=jnp.int32))[None], (batch, seq, seq))

    # 1) causal mask generated in-kernel (no mask DMA at all)
    out1 = jax.block_until_ready(mha(query, keyv, value, is_causal=True))
    ref1 = _reference(mha, query, keyv, value, causal)
    assert out1.shape == (seq, batch, d_model)
    assert jnp.allclose(out1, ref1, atol=5e-3, rtol=5e-3), "causal (in-kernel) mismatch"

    # 2) explicit mask-array path (same causal mask passed as an array)
    out2 = jax.block_until_ready(mha(query, keyv, value, mask=causal))
    assert jnp.allclose(out2, ref1, atol=5e-3, rtol=5e-3), "mask-array path mismatch"

    # 3) no mask
    out3 = jax.block_until_ready(mha(query, keyv, value))
    ref3 = _reference(mha, query, keyv, value, None)
    assert jnp.allclose(out3, ref3, atol=5e-3, rtol=5e-3), "unmasked path mismatch"

    # 4) cross-attention with a different key/value length (non-fused projection path)
    kv_len = 16
    key2 = jax.random.normal(k_k2, (kv_len, batch, d_model), dtype=jnp.float32)
    val2 = jax.random.normal(k_v2, (kv_len, batch, d_model), dtype=jnp.float32)
    out4 = jax.block_until_ready(mha(query, key2, val2))
    ref4 = _reference(mha, query, key2, val2, None)
    assert jnp.allclose(out4, ref4, atol=5e-3, rtol=5e-3), "cross-length path mismatch"

    # 5) bf16 MXU-operand mode (v6e/v7x): same params, looser tolerance vs f32 reference
    mha_bf16 = MultiHeadedAttentionPallas(heads, d_model, k_param,
                                          compute_dtype=jnp.bfloat16)
    out5 = jax.block_until_ready(mha_bf16(query, keyv, value, is_causal=True))
    assert jnp.allclose(out5, ref1, atol=5e-2, rtol=5e-2), "bf16 mode mismatch"

    print("KERNEL_OK")
</pallas_src>

<mosaic_0001>
module attributes {stable_mosaic.version = 11 : i64} {
  func.func @_stacked_linear_kernel(%arg0: i32, %arg1: i32, %arg2: memref<1x16x32xf32, #tpu.memory_space<vmem>>, %arg3: memref<1x32x32xf32, #tpu.memory_space<vmem>>, %arg4: memref<1x1x32xf32, #tpu.memory_space<vmem>>, %arg5: memref<1x16x32xf32, #tpu.memory_space<vmem>>) attributes {dimension_semantics = [#tpu.dimension_semantics<parallel>, #tpu.dimension_semantics<parallel>], iteration_bounds = array<i64: 3, 1>, scalar_prefetch = 0 : i64, scratch_operands = 0 : i64, tpu.core_type = #tpu.core_type<tc>, window_params = [{transform_indices = @transform_0, window_bounds = array<i64: 1, 16, 32>}, {transform_indices = @transform_1, window_bounds = array<i64: 1, 32, 32>}, {transform_indices = @transform_2, window_bounds = array<i64: 1, 1, 32>}, {transform_indices = @transform_3, window_bounds = array<i64: 1, 16, 32>}]} {
    %c0 = arith.constant 0 : index
    %c0_0 = arith.constant 0 : index
    %c0_1 = arith.constant 0 : index
    %0 = vector.load %arg2[%c0, %c0_0, %c0_1] : memref<1x16x32xf32, #tpu.memory_space<vmem>>, vector<1x16x32xf32>
    %1 = vector.shape_cast %0 : vector<1x16x32xf32> to vector<16x32xf32>
    %c0_2 = arith.constant 0 : index
    %c0_3 = arith.constant 0 : index
    %c0_4 = arith.constant 0 : index
    %2 = vector.load %arg3[%c0_2, %c0_3, %c0_4] : memref<1x32x32xf32, #tpu.memory_space<vmem>>, vector<1x32x32xf32>
    %3 = vector.shape_cast %2 : vector<1x32x32xf32> to vector<32x32xf32>
    %cst = arith.constant dense<0.000000e+00> : vector<16x32xf32>
    %4 = tpu.matmul %1, %3, %cst {dimension_numbers = #tpu.dot_dimension_numbers<[1], [0], [0], [1], [0, 0, 1, 1], [], []>} : vector<16x32xf32>, vector<32x32xf32>, vector<16x32xf32> -> vector<16x32xf32>
    %c0_5 = arith.constant 0 : index
    %c0_6 = arith.constant 0 : index
    %c0_7 = arith.constant 0 : index
    %5 = vector.load %arg4[%c0_5, %c0_6, %c0_7] : memref<1x1x32xf32, #tpu.memory_space<vmem>>, vector<1x1x32xf32>
    %6 = vector.shape_cast %5 : vector<1x1x32xf32> to vector<1x32xf32>
    %7 = vector.broadcast %6 : vector<1x32xf32> to vector<16x32xf32>
    %8 = arith.addf %4, %7 : vector<16x32xf32>
    %c0_8 = arith.constant 0 : index
    %c0_9 = arith.constant 0 : index
    %c0_10 = arith.constant 0 : index
    %9 = vector.load %arg5[%c0_8, %c0_9, %c0_10] : memref<1x16x32xf32, #tpu.memory_space<vmem>>, vector<1x16x32xf32>
    %10 = vector.shape_cast %9 : vector<1x16x32xf32> to vector<16x32xf32>
    %11 = vector.shape_cast %8 : vector<16x32xf32> to vector<1x16x32xf32>
    tpu.vector_store %arg5[%c0_8, %c0_9, %c0_10], %11 {strides = array<i32>} : memref<1x16x32xf32, #tpu.memory_space<vmem>>, vector<1x16x32xf32>,
    return
  }
  func.func @transform_0(%arg0: i32, %arg1: i32) -> (i32, i32, i32) {
    %c0_i32 = arith.constant 0 : i32
    %c0_i32_0 = arith.constant 0 : i32
    return %arg0, %arg1, %c0_i32 : i32, i32, i32
  }
  func.func @transform_1(%arg0: i32, %arg1: i32) -> (i32, i32, i32) {
    %c0_i32 = arith.constant 0 : i32
    %c0_i32_0 = arith.constant 0 : i32
    %c0_i32_1 = arith.constant 0 : i32
    return %arg0, %c0_i32, %c0_i32_0 : i32, i32, i32
  }
  func.func @transform_2(%arg0: i32, %arg1: i32) -> (i32, i32, i32) {
    %c0_i32 = arith.constant 0 : i32
    %c0_i32_0 = arith.constant 0 : i32
    %c0_i32_1 = arith.constant 0 : i32
    return %arg0, %c0_i32, %c0_i32_0 : i32, i32, i32
  }
  func.func @transform_3(%arg0: i32, %arg1: i32) -> (i32, i32, i32) {
    %c0_i32 = arith.constant 0 : i32
    %c0_i32_0 = arith.constant 0 : i32
    return %arg0, %arg1, %c0_i32 : i32, i32, i32
  }
}

</mosaic_0001>

<llo_original>
// kernel: tpu_custom_call.1
$region0: #{tpu_custom_call.1}
  #allocation0 [shape = 'u32[]', space=smem, size = 0x4, offset = 0x4, fixed_abs, tag = 'smem constant byte address 0x4 - core index']
  #allocation1 [shape = 'u32[144,128]{1,0:T(1,128)}', space=vmem, size = 0x12000, scoped, tag = 'internal scratch']
  %s0 = inlined_call_operand.hbm [shape: f32[3,16,32], index: 0, kind: input, shape index: {}]
  %s1 = inlined_call_operand.hbm [shape: f32[3,32,32], index: 1, kind: input, shape index: {}]
  %s2 = inlined_call_operand.vmem [shape: f32[3,1,32], index: 2, kind: input, shape index: {}]
  %s3 = inlined_call_operand.hbm [shape: f32[3,16,32], index: 3, kind: output, shape index: {}]
  %s4 = sld [smem:[#allocation0]]
  $region53: #{tpu_custom_call.1} parent=0
    _
  %s6 = ssub.s32 1, %s4
  %s7 = scalar_select 0, %s6, %s4
  $region1: #{tpu_custom_call.1} parent=0
    #allocation2 [shape = 'u8[16384]{0}', space=vmem, size = 0x4000, scoped, tag = 'input window, operand 0']
    #allocation3 [shape = 's32[2]{0}', space=sflag, size = 0x8, scoped, tag = 'scoped memory for tpu_custom_call.1']
    #allocation4 [shape = 's32[2]{0}', space=sflag, size = 0x8, scoped, tag = 'scoped memory for tpu_custom_call.1']
    #allocation5 [shape = 'u8[32768]{0}', space=vmem, size = 0x8000, scoped, tag = 'input window, operand 1']
    #allocation6 [shape = 's32[2]{0}', space=sflag, size = 0x8, scoped, tag = 'scoped memory for tpu_custom_call.1']
    #allocation7 [shape = 'u8[16384]{0}', space=vmem, size = 0x4000, scoped, tag = 'output window, operand 0']
    %8 = vsyncpa [#allocation3], 0
    %s9 = scalar_lea.sflag [#allocation3], 1
    %10 = vsyncpa %s9, 0
    %11 = vsyncpa [#allocation6], 0
    %s12 = scalar_lea.sflag [#allocation6], 1
    %13 = vsyncpa %s12, 0
    %14 = vsyncpa [#allocation4], 0
    %s15 = scalar_lea.sflag [#allocation4], 1
    %16 = vsyncpa %s15, 0
    loop: start=0, step=1, limit=5
    $region2: #{tpu_custom_call.1} parent=1 // loop_pre_header
      _
    $region3: #{tpu_custom_call.1} parent=1 // loop_header
      %s18 = sphi 0, %s22
      %p19 = scmp.ge.s32.totalorder %s18, 5
      %s25 = sphi 0, %s37
      %s26 = sphi 0, %s33
      %s27 = sphi 0, %s25
      %s28 = sphi 0, %s26
      %s29 = sphi 0, %s27
      %s30 = sphi 0, %s28
      %s42 = sphi 0, %s44
      %s45 = sphi 0, %s42
      %s46 = sphi 0, %s45
      %s62 = sphi 0, %s46
      %s68 = sphi 0, %s70
      %s71 = sphi 0, %s68
      %s72 = sphi 0, %s71
      %s88 = sphi 0, %s72
      %s94 = sphi 0, %s96
      %s97 = sphi 0, %s94
      %s98 = sphi 0, %s97
      %s114 = sphi 0, %s98
      %s122 = sphi 0, %s124
      %s125 = sphi 0, %s122
      %s126 = sphi 0, %s125
      %s142 = sphi 0, %s126
    $region4: #{tpu_custom_call.1} parent=1 // loop_header_branch
      %21 = sbr.rel (%p19) target = $region8
    $region5: #{tpu_custom_call.1} parent=1 // loop_body
      %s23 = ssub.s32 %s18, 1
      %s24 = ssub.s32 %s18, 2
      %s31 = sadd.s32 1, %s26
      %p32 = scmp.ge.s32.totalorder %s31, 1
      %s33 = scalar_select %p32, 0, %s31
      %s34 = sadd.s32 1, %s25
      %s35 = scalar_select %p32, %s34, %s25
      %p36 = scmp.ge.s32.totalorder %s35, 3
      %s37 = scalar_select %p36, 0, %s35
      %s38 = ssub.s32 %s25, %s37
      %s39 = ssub.s32 %s26, %s33
      %s40 = sor.u32 %s38, %s39
      %p41 = scmp.eq.s32.totalorder %s40, 0
      %s43 = sadd.s32 %s42, 1
      %s44 = scalar_select %p41, %s42, %s43
      %p47 = pneg %p41
      %p48 = scmp.eq.s32.totalorder %s18, 2
      %p49 = por %p47, %p48
      %p50 = scmp.ne.s32.totalorder %s42, %s45
      %p51 = scmp.eq.s32.totalorder %s18, 0
      %p52 = por %p50, %p51
      %p53 = scmp.ne.s32.totalorder %s42, %s45
      %p54 = scmp.eq.s32.totalorder %s23, 2
      %p55 = por %p53, %p54
      %p56 = scmp.ne.s32.totalorder %s45, %s46
      %p57 = scmp.eq.s32.totalorder %s23, 0
      %p58 = por %p56, %p57
      %p59 = scmp.ne.s32.totalorder %s45, %s46
      %p60 = scmp.eq.s32.totalorder %s24, 2
      %p61 = por %p59, %p60
      %p63 = scmp.ne.s32.totalorder %s46, %s62
      %p64 = scmp.eq.s32.totalorder %s24, 0
      %p65 = por %p63, %p64
      %s66 = ssub.s32 %s25, %s37
      %p67 = scmp.eq.s32.totalorder %s66, 0
      %s69 = sadd.s32 %s68, 1
      %s70 = scalar_select %p67, %s68, %s69
      %p73 = pneg %p67
      %p74 = scmp.eq.s32.totalorder %s18, 2
      %p75 = por %p73, %p74
      %p76 = scmp.ne.s32.totalorder %s68, %s71
      %p77 = scmp.eq.s32.totalorder %s18, 0
      %p78 = por %p76, %p77
      %p79 = scmp.ne.s32.totalorder %s68, %s71
      %p80 = scmp.eq.s32.totalorder %s23, 2
      %p81 = por %p79, %p80
      %p82 = scmp.ne.s32.totalorder %s71, %s72
      %p83 = scmp.eq.s32.totalorder %s23, 0
      %p84 = por %p82, %p83
      %p85 = scmp.ne.s32.totalorder %s71, %s72
      %p86 = scmp.eq.s32.totalorder %s24, 2
      %p87 = por %p85, %p86
      %p89 = scmp.ne.s32.totalorder %s72, %s88
      %p90 = scmp.eq.s32.totalorder %s24, 0
      %p91 = por %p89, %p90
      %s92 = ssub.s32 %s25, %s37
      %p93 = scmp.eq.s32.totalorder %s92, 0
      %s95 = sadd.s32 %s94, 1
      %s96 = scalar_select %p93, %s94, %s95
      %p99 = pneg %p93
      %p100 = scmp.eq.s32.totalorder %s18, 2
      %p101 = por %p99, %p100
      %p102 = scmp.ne.s32.totalorder %s94, %s97
      %p103 = scmp.eq.s32.totalorder %s18, 0
      %p104 = por %p102, %p103
      %p105 = scmp.ne.s32.totalorder %s94, %s97
      %p106 = scmp.eq.s32.totalorder %s23, 2
      %p107 = por %p105, %p106
      %p108 = scmp.ne.s32.totalorder %s97, %s98
      %p109 = scmp.eq.s32.totalorder %s23, 0
      %p110 = por %p108, %p109
      %p111 = scmp.ne.s32.totalorder %s97, %s98
      %p112 = scmp.eq.s32.totalorder %s24, 2
      %p113 = por %p111, %p112
      %p115 = scmp.ne.s32.totalorder %s98, %s114
      %p116 = scmp.eq.s32.totalorder %s24, 0
      %p117 = por %p115, %p116
      %s118 = ssub.s32 %s25, %s37
      %s119 = ssub.s32 %s26, %s33
      %s120 = sor.u32 %s118, %s119
      %p121 = scmp.eq.s32.totalorder %s120, 0
      %s123 = sadd.s32 %s122, 1
      %s124 = scalar_select %p121, %s122, %s123
      %p127 = pneg %p121
      %p128 = scmp.eq.s32.totalorder %s18, 2
      %p129 = por %p127, %p128
      %p130 = scmp.ne.s32.totalorder %s122, %s125
      %p131 = scmp.eq.s32.totalorder %s18, 0
      %p132 = por %p130, %p131
      %p133 = scmp.ne.s32.totalorder %s122, %s125
      %p134 = scmp.eq.s32.totalorder %s23, 2
      %p135 = por %p133, %p134
      %p136 = scmp.ne.s32.totalorder %s125, %s126
      %p137 = scmp.eq.s32.totalorder %s23, 0
      %p138 = por %p136, %p137
      %p139 = scmp.ne.s32.totalorder %s125, %s126
      %p140 = scmp.eq.s32.totalorder %s24, 2
      %p141 = por %p139, %p140
      %p143 = scmp.ne.s32.totalorder %s126, %s142
      %p144 = scmp.eq.s32.totalorder %s24, 0
      %p145 = por %p143, %p144
      %p146 = scmp.le.s32.totalorder 1, %s18
      %p147 = scmp.lt.s32.totalorder %s18, 4
      %p148 = pnand %p146, %p147
      %p149 = pneg %p148
      // Predicated region
      $region9: #{tpu_custom_call.1} parent=5 // pred_check
        _
      $region10: #{tpu_custom_call.1} parent=5 // pred_check_branch
        %151 = sbr.rel (%p148) target = $region12
      $region11: #{tpu_custom_call.1} parent=5 // pred_region
        %s152 = ssub.s32 %s18, 1
      $region12: #{tpu_custom_call.1} parent=5 // pred_fallthru
        _
      %p153 = scmp.lt.s32.totalorder %s18, 3
      // Predicated region
      $region13: #{tpu_custom_call.1} parent=5 // pred_check
        %p154 = pneg %p153
      $region14: #{tpu_custom_call.1} parent=5 // pred_check_branch
        %156 = sbr.rel (%p154) target = $region16
      $region15: #{tpu_custom_call.1} parent=5 // pred_region
        // Predicated region
        $region17: #{tpu_custom_call.1} parent=15 // pred_check
          %p157 = pneg %p52
        $region18: #{tpu_custom_call.1} parent=15 // pred_check_branch
          %159 = sbr.rel (%p157) target = $region20
        $region19: #{tpu_custom_call.1} parent=15 // pred_region
          %s160 = sand.u32 %s42, 1
          %s161 = scalar_lea.sflag [#allocation3], %s160
          %s162 = sand.u32 %s42, 1
          %s163 = smul.addr %s162, 16
          %s164 = scalar_lea.vmem [#allocation2], %s163
          %s165 = smul.u32 2, %s26
          %s167 = ssub.s32 256, 256
          %168 = vsyncadd %s161, %s167
          %s169 = smul.addr %s25, 2
          %s170 = sadd.s32 %s165, %s169
          %s171 = smul.addr %s170, 128
          %s172 = scalar_lea.hbm %s0, %s171
          %s173 = sshll.u32 %s164, 4
          %s174 = int_to_ptr.vmem [resolvable:$true] %s173
          %179 = dma.hbm_to_vmem [thread:$0]  %s172, 256, %s174, %s161, 128, 128, 8
        $region20: #{tpu_custom_call.1} parent=15 // pred_fallthru
          _
        // Predicated region
        $region21: #{tpu_custom_call.1} parent=15 // pred_check
          %p180 = pneg %p78
        $region22: #{tpu_custom_call.1} parent=15 // pred_check_branch
          %182 = sbr.rel (%p180) target = $region24
        $region23: #{tpu_custom_call.1} parent=15 // pred_region
          %s183 = sand.u32 %s68, 1
          %s184 = scalar_lea.sflag [#allocation6], %s183
          %s185 = sand.u32 %s68, 1
          %s186 = smul.addr %s185, 32
          %s187 = scalar_lea.vmem [#allocation5], %s186
          %s189 = ssub.s32 512, 512
          %190 = vsyncadd %s184, %s189
          %s191 = smul.addr %s25, 4
          %s192 = smul.addr %s191, 128
          %s193 = scalar_lea.hbm %s1, %s192
          %s194 = sshll.u32 %s187, 4
          %s195 = int_to_ptr.vmem [resolvable:$true] %s194
          %200 = dma.hbm_to_vmem [thread:$0]  %s193, 512, %s195, %s184, 128, 128, 8
        $region24: #{tpu_custom_call.1} parent=15 // pred_fallthru
          _
        // Predicated region
        $region25: #{tpu_custom_call.1} parent=15 // pred_check
          %p201 = pneg %p104
        $region26: #{tpu_custom_call.1} parent=15 // pred_check_branch
          %203 = sbr.rel (%p201) target = $region28
        $region27: #{tpu_custom_call.1} parent=15 // pred_region
          %p204 = scmp.lt.s32.totalorder %s25, 2
          %s205 = scalar_select %p204, %s25, 2
          %s206 = scalar_lea.vmem %s2, %s205
        $region28: #{tpu_custom_call.1} parent=15 // pred_fallthru
          _
      $region16: #{tpu_custom_call.1} parent=5 // pred_fallthru
        _
      %p207 = scmp.le.s32.totalorder 1, %s18
      %p208 = scmp.lt.s32.totalorder %s18, 4
      %p209 = pnand %p207, %p208
      %p210 = pneg %p209
      // Predicated region
      $region29: #{tpu_custom_call.1} parent=5 // pred_check
        _
      $region30: #{tpu_custom_call.1} parent=5 // pred_check_branch
        %212 = sbr.rel (%p209) target = $region32
      $region31: #{tpu_custom_call.1} parent=5 // pred_region
        %s213 = ssub.s32 %s18, 1
        %s214 = sand.u32 %s45, 1
        %s215 = scalar_lea.sflag [#allocation3], %s214
        %s216 = sand.u32 %s45, 1
        %s217 = smul.addr %s216, 16
        %s218 = scalar_lea.vmem [#allocation2], %s217
        // Predicated region
        $region33: #{tpu_custom_call.1} parent=31 // pred_check
          %p219 = pneg %p58
        $region34: #{tpu_custom_call.1} parent=31 // pred_check_branch
          %221 = sbr.rel (%p219) target = $region36
        $region35: #{tpu_custom_call.1} parent=31 // pred_region
          %222 = dma.done %s215, 256
        $region36: #{tpu_custom_call.1} parent=31 // pred_fallthru
          _
        %s223 = sand.u32 %s71, 1
        %s224 = scalar_lea.sflag [#allocation6], %s223
        %s225 = sand.u32 %s71, 1
        %s226 = smul.addr %s225, 32
        %s227 = scalar_lea.vmem [#allocation5], %s226
        // Predicated region
        $region37: #{tpu_custom_call.1} parent=31 // pred_check
          %p228 = pneg %p84
        $region38: #{tpu_custom_call.1} parent=31 // pred_check_branch
          %230 = sbr.rel (%p228) target = $region40
        $region39: #{tpu_custom_call.1} parent=31 // pred_region
          %231 = dma.done %s224, 512
        $region40: #{tpu_custom_call.1} parent=31 // pred_fallthru
          _
        %s232 = sand.u32 %s45, 1
        %s233 = scalar_lea.sflag [#allocation3], %s232
        %s234 = sand.u32 %s45, 1
        %s235 = smul.addr %s234, 16
        %s236 = scalar_lea.vmem [#allocation2], %s235
        %p237 = pneg %p58
        %p238 = pneg %p55
        %s239 = sand.u32 %s71, 1
        %s240 = scalar_lea.sflag [#allocation6], %s239
        %s241 = sand.u32 %s71, 1
        %s242 = smul.addr %s241, 32
        %s243 = scalar_lea.vmem [#allocation5], %s242
        %p244 = pneg %p84
        %p245 = pneg %p81
        %p246 = scmp.lt.s32.totalorder %s27, 2
        %s247 = scalar_select %p246, %s27, 2
        %s248 = scalar_lea.vmem %s2, %s247
        %p249 = pneg %p110
        %p250 = pneg %p107
        %p251 = pneg %p138
        %p252 = pneg %p135
        %s253 = sand.u32 %s125, 1
        %s254 = scalar_lea.sflag [#allocation4], %s253
        %s255 = sand.u32 %s125, 1
        %s256 = smul.addr %s255, 16
        %s257 = scalar_lea.vmem [#allocation7], %s256
        %s258 = smul.u32 2, %s28
        %p259 = scmp.lt.s32.totalorder %s27, 2
        %s260 = scalar_select %p259, %s27, 2
        %s261 = scalar_lea.vmem %s2, %s260
        %s262 = smul.u32 2, %s28
        %v263 = vld [vmem:[%s218] sm:$0xff]
        %v264 = vld [vmem:[%s218 + $0x8] sm:$0xff]
        %v265 = vld [vmem:[%s227] sm:$0xff]
        %v266 = vld [vmem:[%s227 + $0x8] sm:$0xff]
        %v267 = vld [vmem:[%s227 + $0x10] sm:$0xff]
        %v268 = vld [vmem:[%s227 + $0x18] sm:$0xff]
        %v269 = vld [vmem:[%s261] sm:$0x1]
        %v271 = vlaneseq
        %v272 = vshrl.u32 %v271, 7
        %v273 = vsub.s32 0, %v272
        %v274 = vrot.slane %v269, %v273
        %vm276 = vcmask 261120
        %v278 = vsel %vm276, %v263, 0
        %v281 = vsel %vm276, %v264, 0
        %283 = vmatprep.subr.mxu0 0.0
        %284 = vmatpush1.msra.mxu0 %v265
        %285 = vmatprep.subr.mxu0 0.0
        %286 = vmatpush1.msra.mxu0 %v266
        %287 = vmatprep.subr.mxu0 0.0
        %288 = vmatpush1.msra.mxu0 %v267
        %289 = vmatprep.subr.mxu0 0.0
        %290 = vmatpush1.msra.mxu0 %v268
        %291 = vmatprep.subr.mxu0 0.0
        %292 = vmatpush1.msra.mxu0 0.0
        %293 = vmatprep.subr.mxu0 0.0
        %294 = vmatpush1.msra.mxu0 0.0
        %295 = vmatprep.subr.mxu0 0.0
        %296 = vmatpush1.msra.mxu0 0.0
        %297 = vmatprep.subr.mxu0 0.0
        %298 = vmatpush1.msra.mxu0 0.0
        %299 = vmatprep.subr.mxu0 0.0
        %300 = vmatpush1.msra.mxu0 0.0
        %301 = vmatprep.subr.mxu0 0.0
        %302 = vmatpush1.msra.mxu0 0.0
        %303 = vmatprep.subr.mxu0 0.0
        %304 = vmatpush1.msra.mxu0 0.0
        %305 = vmatprep.subr.mxu0 0.0
        %306 = vmatpush1.msra.mxu0 0.0
        %307 = vmatprep.subr.mxu0 0.0
        %308 = vmatpush1.msra.mxu0 0.0
        %309 = vmatprep.subr.mxu0 0.0
        %310 = vmatpush1.msra.mxu0 0.0
        %311 = vmatprep.subr.mxu0 0.0
        %312 = vmatpush1.msra.mxu0 0.0
        %313 = vmatprep.subr.mxu0 0.0
        %314 = vmatpush1.msra.mxu0 0.0
        %315 = vmatprep.subr.mxu0 0.0
        %316 = vmatpush1.msra.mxu0 0.0
        %317 = vmatprep.subr.mxu0 0.0
        %318 = vmatpush1.msra.mxu0 0.0
        %319 = vmatprep.subr.mxu0 0.0
        %320 = vmatpush1.msra.mxu0 0.0
        %321 = vmatprep.subr.mxu0 0.0
        %322 = vmatpush1.msra.mxu0 0.0
        %323 = vmatprep.subr.mxu0 0.0
        %324 = vmatpush1.msra.mxu0 0.0
        %325 = vmatprep.subr.mxu0 0.0
        %326 = vmatpush1.msra.mxu0 0.0
        %327 = vmatprep.subr.mxu0 0.0
        %328 = vmatpush1.msra.mxu0 0.0
        %329 = vmatprep.subr.mxu0 0.0
        %330 = vmatpush1.msra.mxu0 0.0
        %331 = vmatprep.subr.mxu0 0.0
        %332 = vmatpush1.msra.mxu0 0.0
        %333 = vmatprep.subr.mxu0 0.0
        %334 = vmatpush1.msra.mxu0 0.0
        %335 = vmatprep.subr.mxu0 0.0
        %336 = vmatpush1.msra.mxu0 0.0
        %337 = vmatprep.subr.mxu0 0.0
        %338 = vmatpush1.msra.mxu0 0.0
        %339 = vmatprep.subr.mxu0 0.0
        %340 = vmatpush1.msra.mxu0 0.0
        %341 = vmatprep.subr.mxu0 0.0
        %342 = vmatpush1.msra.mxu0 0.0
        %343 = vmatprep.subr.mxu0 0.0
        %344 = vmatpush1.msra.mxu0 0.0
        %345 = vmatprep.subr.mxu0 0.0
        %346 = vmatpush1.msra.mxu0 0.0
        %347 = vmatprep.mubr.f32.mxu0 0.0
        %348 = vmatmul.mubr.f32.gmra.mrb[0].mxu0 %v278
        %v349 = vpop.f32.mrb[0].mxu0
        %v350 = vadd.f32 %v274, %v349
        %v351 = vpop.f32.mrb[0].mxu0
        %352 = vmatprep.mubr.f32.mxu0 0.0
        %353 = vmatmul.mubr.f32.gmra.mrb[0].mxu0 %v281
        %v354 = vpop.f32.mrb[0].mxu0
        %v355 = vadd.f32 %v274, %v354
        %v356 = vpop.f32.mrb[0].mxu0
        %357 = vdwg.mxu0
        %358 = vst.msk [vmem:[%s257] sm:$0xff] %vm276, %v350
        %359 = vst.msk [vmem:[%s257 + $0x8] sm:$0xff] %vm276, %v355
        %s360 = sand.u32 %s125, 1
        %s361 = scalar_lea.sflag [#allocation4], %s360
        %s362 = sand.u32 %s125, 1
        %s363 = smul.addr %s362, 16
        %s364 = scalar_lea.vmem [#allocation7], %s363
        // Predicated region
        $region41: #{tpu_custom_call.1} parent=31 // pred_check
          %p365 = pneg %p135
        $region42: #{tpu_custom_call.1} parent=31 // pred_check_branch
          %367 = sbr.rel (%p365) target = $region44
        $region43: #{tpu_custom_call.1} parent=31 // pred_region
          %s368 = smul.u32 2, %s28
          %s370 = ssub.s32 256, 256
          %371 = vsyncadd %s361, %s370
          %s372 = smul.addr %s27, 2
          %s373 = sadd.s32 %s368, %s372
          %s374 = smul.addr %s373, 128
          %s375 = scalar_lea.hbm %s3, %s374
          %s376 = sshll.u32 %s364, 4
          %s377 = int_to_ptr.vmem [resolvable:$true] %s376
          %382 = dma.vmem_to_hbm [thread:$0]  %s377, 256, %s375, %s361, 128, 128, 8
        $region44: #{tpu_custom_call.1} parent=31 // pred_fallthru
          _
      $region32: #{tpu_custom_call.1} parent=5 // pred_fallthru
        _
      %p383 = scmp.le.s32.totalorder 2, %s18
      // Predicated region
      $region45: #{tpu_custom_call.1} parent=5 // pred_check
        %p384 = pneg %p383
      $region46: #{tpu_custom_call.1} parent=5 // pred_check_branch
        %386 = sbr.rel (%p384) target = $region48
      $region47: #{tpu_custom_call.1} parent=5 // pred_region
        %s387 = ssub.s32 %s18, 2
        // Predicated region
        $region49: #{tpu_custom_call.1} parent=47 // pred_check
          %p388 = pneg %p141
        $region50: #{tpu_custom_call.1} parent=47 // pred_check_branch
          %390 = sbr.rel (%p388) target = $region52
        $region51: #{tpu_custom_call.1} parent=47 // pred_region
          %s391 = sand.u32 %s126, 1
          %s392 = scalar_lea.sflag [#allocation4], %s391
          %s393 = sand.u32 %s126, 1
          %s394 = smul.addr %s393, 16
          %s395 = scalar_lea.vmem [#allocation7], %s394
          %396 = dma.done %s392, 256
        $region52: #{tpu_custom_call.1} parent=47 // pred_fallthru
          _
      $region48: #{tpu_custom_call.1} parent=5 // pred_fallthru
        _
    $region6: #{tpu_custom_call.1} parent=1 // loop_footer
      %s22 = sadd.s32 1, %s18
    $region7: #{tpu_custom_call.1} parent=1 // loop_footer_branch
      %17 = sbr.rel target = $region3
    $region8: #{tpu_custom_call.1} parent=1 // loop_exit
      _
    %397 = vsyncpa [#allocation3], 1
    %s398 = scalar_lea.sflag [#allocation3], 1
    %399 = vsyncpa %s398, 1
    %400 = vsyncpa [#allocation6], 1
    %s401 = scalar_lea.sflag [#allocation6], 1
    %402 = vsyncpa %s401, 1
    %403 = vsyncpa [#allocation4], 1
    %s404 = scalar_lea.sflag [#allocation4], 1
    %405 = vsyncpa %s404, 1

</llo_original>
